<compile_context>
chip_gen: v6e
topology: v6e:2x2x1
jax: 0.10.0
libtpu: 0.0.40
codegen_flags: <defaults>
</compile_context>

<pallas_src>
import functools

import jax
import jax.numpy as jnp
from jax.experimental import pallas as pl
from jax.experimental.pallas import tpu as pltpu


def se_kernel(x_ref, w1t_ref, w2t_ref, o_ref, *, inv_l):
    # x_ref:   (TB, C, L) tile of the input
    # w1t_ref: (C, H)  -- transpose of PyTorch Linear(C, C//r).weight
    # w2t_ref: (H, C)  -- transpose of PyTorch Linear(C//r, C).weight
    x = x_ref[...]                                                      # (TB, C, L) native dtype

    # squeeze: global average pool over L (accumulate in f32, fold 1/L constant)
    pooled = jnp.sum(x, axis=-1, dtype=jnp.float32) * inv_l             # (TB, C) f32

    # excitation: batched GEMMs, lane-dense, all small (negligible FLOPs)
    h = jnp.dot(pooled, w1t_ref[...], preferred_element_type=jnp.float32)   # (TB, H)
    h = jnp.maximum(h, 0.0)
    z = jnp.dot(h, w2t_ref[...], preferred_element_type=jnp.float32)        # (TB, C)
    scale = jax.nn.sigmoid(z).astype(x.dtype)                                # (TB, C)

    # channel-wise rescale in the input dtype, broadcast over L
    o_ref[...] = (x * scale[:, :, None]).astype(o_ref.dtype)


def _pick_batch_tile(B, C, L, itemsize, target_bytes=2 << 20):
    """Largest divisor of B whose (TB, C, L) tile is <= ~target_bytes (at least 1)."""
    per_b = max(1, C * L * itemsize)
    tb = max(1, min(B, target_bytes // per_b))
    while B % tb != 0:
        tb -= 1
    return tb


def se_layer(x, w1, w2):
    """x: (B, C, L); w1: (H, C) = fc1.weight; w2: (C, H) = fc2.weight."""
    B, C, L = x.shape
    H = w1.shape[0]
    assert w1.shape == (H, C) and w2.shape == (C, H)

    TB = _pick_batch_tile(B, C, L, x.dtype.itemsize)
    grid = (B // TB,)

    # Pre-transpose weights once outside the kernel so the excitation is a
    # plain row-major batched GEMM (no in-kernel XLU transposes).
    w1t = jnp.asarray(w1).T  # (C, H)
    w2t = jnp.asarray(w2).T  # (H, C)

    kernel = functools.partial(se_kernel, inv_l=1.0 / float(L))

    return pl.pallas_call(
        kernel,
        out_shape=jax.ShapeDtypeStruct((B, C, L), x.dtype),
        grid_spec=pltpu.PrefetchScalarGridSpec(
            num_scalar_prefetch=0,
            grid=grid,
            in_specs=[
                pl.BlockSpec((TB, C, L), lambda b: (b, 0, 0)),  # TB batch elems per step
                pl.BlockSpec((C, H), lambda b: (0, 0)),         # weights resident across grid
                pl.BlockSpec((H, C), lambda b: (0, 0)),
            ],
            out_specs=pl.BlockSpec((TB, C, L), lambda b: (b, 0, 0)),
        ),
        compiler_params=pltpu.CompilerParams(
            dimension_semantics=("parallel",),
        ),
    )(x, w1t, w2t)
    # TODO(synk): for very large C*L (block > ~8 MiB, v7x 64 MiB VMEM), split into a
    # squeeze/excite pass producing (B, C) scales plus an L-tiled elementwise rescale pass.


def se_layer_ref(x, w1, w2):
    # pure-JAX reference mirroring the PyTorch forward
    y = jnp.mean(x, axis=-1)                       # (B, C)
    h = jnp.maximum(y @ w1.T, 0.0)                 # (B, H)
    s = jax.nn.sigmoid(h @ w2.T)                   # (B, C)
    return x * s[:, :, None]


if __name__ == "__main__":
    B, C, L = 2, 64, 128
    reduction = 16
    H = C // reduction

    key = jax.random.PRNGKey(0)
    kx, k1, k2 = jax.random.split(key, 3)

    x = jax.random.normal(kx, (B, C, L), dtype=jnp.float32)
    # deterministic Kaiming-uniform-like init (matches PyTorch Linear weight shapes)
    bound1 = 1.0 / (C ** 0.5)
    bound2 = 1.0 / (H ** 0.5)
    w1 = jax.random.uniform(k1, (H, C), dtype=jnp.float32, minval=-bound1, maxval=bound1)
    w2 = jax.random.uniform(k2, (C, H), dtype=jnp.float32, minval=-bound2, maxval=bound2)

    out = se_layer(x, w1, w2)
    out = jax.block_until_ready(out)

    ref = se_layer_ref(x, w1, w2)
    assert out.shape == (B, C, L)
    assert jnp.allclose(out, ref, atol=1e-5, rtol=1e-5), "Pallas SELayer mismatch vs reference"

    print("KERNEL_OK")
</pallas_src>

<mosaic_0001>
module attributes {stable_mosaic.version = 11 : i64} {
  func.func @se_kernel(%arg0: i32, %arg1: memref<2x64x128xf32, #tpu.memory_space<vmem>>, %arg2: memref<64x4xf32, #tpu.memory_space<vmem>>, %arg3: memref<4x64xf32, #tpu.memory_space<vmem>>, %arg4: memref<2x64x128xf32, #tpu.memory_space<vmem>>) attributes {dimension_semantics = [#tpu.dimension_semantics<parallel>], iteration_bounds = array<i64: 1>, scalar_prefetch = 0 : i64, scratch_operands = 0 : i64, tpu.core_type = #tpu.core_type<tc>, window_params = [{transform_indices = @transform_0, window_bounds = array<i64: 2, 64, 128>}, {pipeline_mode = #tpu.pipeline_mode<synchronous>, transform_indices = @transform_1, window_bounds = array<i64: 64, 4>}, {pipeline_mode = #tpu.pipeline_mode<synchronous>, transform_indices = @transform_2, window_bounds = array<i64: 4, 64>}, {transform_indices = @transform_3, window_bounds = array<i64: 2, 64, 128>}]} {
    %c0 = arith.constant 0 : index
    %c0_0 = arith.constant 0 : index
    %c0_1 = arith.constant 0 : index
    %0 = vector.load %arg1[%c0, %c0_0, %c0_1] : memref<2x64x128xf32, #tpu.memory_space<vmem>>, vector<2x64x128xf32>
    %cst = arith.constant dense<0.000000e+00> : vector<2x64xf32>
    %1 = vector.multi_reduction <add>, %0, %cst [2] : vector<2x64x128xf32> to vector<2x64xf32>
    %cst_2 = arith.constant 7.812500e-03 : f32
    %2 = vector.broadcast %cst_2 : f32 to vector<2x64xf32>
    %3 = arith.mulf %1, %2 : vector<2x64xf32>
    %c0_3 = arith.constant 0 : index
    %c0_4 = arith.constant 0 : index
    %4 = vector.load %arg2[%c0_3, %c0_4] : memref<64x4xf32, #tpu.memory_space<vmem>>, vector<64x4xf32>
    %cst_5 = arith.constant dense<0.000000e+00> : vector<2x4xf32>
    %5 = tpu.matmul %3, %4, %cst_5 {dimension_numbers = #tpu.dot_dimension_numbers<[1], [0], [0], [1], [0, 0, 1, 1], [], []>} : vector<2x64xf32>, vector<64x4xf32>, vector<2x4xf32> -> vector<2x4xf32>
    %cst_6 = arith.constant 0.000000e+00 : f32
    %6 = vector.broadcast %cst_6 : f32 to vector<2x4xf32>
    %7 = arith.maximumf %5, %6 : vector<2x4xf32>
    %c0_7 = arith.constant 0 : index
    %c0_8 = arith.constant 0 : index
    %8 = vector.load %arg3[%c0_7, %c0_8] : memref<4x64xf32, #tpu.memory_space<vmem>>, vector<4x64xf32>
    %cst_9 = arith.constant dense<0.000000e+00> : vector<2x64xf32>
    %9 = tpu.matmul %7, %8, %cst_9 {dimension_numbers = #tpu.dot_dimension_numbers<[1], [0], [0], [1], [0, 0, 1, 1], [], []>} : vector<2x4xf32>, vector<4x64xf32>, vector<2x64xf32> -> vector<2x64xf32>
    %10 = arith.negf %9 : vector<2x64xf32>
    %11 = math.exp %10 : vector<2x64xf32>
    %cst_10 = arith.constant 1.000000e+00 : f32
    %12 = vector.broadcast %cst_10 : f32 to vector<2x64xf32>
    %13 = arith.addf %12, %11 : vector<2x64xf32>
    %14 = arith.divf %12, %13 : vector<2x64xf32>
    %15 = vector.shape_cast %14 : vector<2x64xf32> to vector<2x64x1xf32>
    %16 = vector.broadcast %15 : vector<2x64x1xf32> to vector<2x64x128xf32>
    %17 = arith.mulf %0, %16 : vector<2x64x128xf32>
    %c0_11 = arith.constant 0 : index
    %c0_12 = arith.constant 0 : index
    %c0_13 = arith.constant 0 : index
    %18 = vector.load %arg4[%c0_11, %c0_12, %c0_13] : memref<2x64x128xf32, #tpu.memory_space<vmem>>, vector<2x64x128xf32>
    tpu.vector_store %arg4[%c0_11, %c0_12, %c0_13], %17 {strides = array<i32>} : memref<2x64x128xf32, #tpu.memory_space<vmem>>, vector<2x64x128xf32>,
    return
  }
  func.func @transform_0(%arg0: i32) -> (i32, i32, i32) {
    %c0_i32 = arith.constant 0 : i32
    %c0_i32_0 = arith.constant 0 : i32
    %c0_i32_1 = arith.constant 0 : i32
    return %arg0, %c0_i32, %c0_i32_0 : i32, i32, i32
  }
  func.func @transform_1(%arg0: i32) -> (i32, i32) {
    %c0_i32 = arith.constant 0 : i32
    %c0_i32_0 = arith.constant 0 : i32
    %c0_i32_1 = arith.constant 0 : i32
    return %c0_i32, %c0_i32_0 : i32, i32
  }
  func.func @transform_2(%arg0: i32) -> (i32, i32) {
    %c0_i32 = arith.constant 0 : i32
    %c0_i32_0 = arith.constant 0 : i32
    %c0_i32_1 = arith.constant 0 : i32
    return %c0_i32, %c0_i32_0 : i32, i32
  }
  func.func @transform_3(%arg0: i32) -> (i32, i32, i32) {
    %c0_i32 = arith.constant 0 : i32
    %c0_i32_0 = arith.constant 0 : i32
    %c0_i32_1 = arith.constant 0 : i32
    return %arg0, %c0_i32, %c0_i32_0 : i32, i32, i32
  }
}

</mosaic_0001>

<llo_original>
// kernel: tpu_custom_call.1
$region0: #{tpu_custom_call.1}
  #allocation0 [shape = 'u32[]', space=smem, size = 0x4, offset = 0x4, fixed_abs, tag = 'smem constant byte address 0x4 - core index']
  #allocation1 [shape = 'u32[144,128]{1,0:T(1,128)}', space=vmem, size = 0x12000, scoped, tag = 'internal scratch']
  %s0 = inlined_call_operand.hbm [shape: f32[2,64,128], index: 0, kind: input, shape index: {}]
  %s1 = inlined_call_operand.vmem [shape: f32[64,4], index: 1, kind: input, shape index: {}]
  %s2 = inlined_call_operand.vmem [shape: f32[4,64], index: 2, kind: input, shape index: {}]
  %s3 = inlined_call_operand.hbm [shape: f32[2,64,128], index: 3, kind: output, shape index: {}]
  %s4 = sld [smem:[#allocation0]]
  $region26: #{tpu_custom_call.1} parent=0
    _
  %s6 = ssub.s32 1, %s4
  %s7 = scalar_select 0, %s6, %s4
  $region1: #{tpu_custom_call.1} parent=0
    #allocation2 [shape = 'u8[65536]{0}', space=vmem, size = 0x10000, scoped, tag = 'input window, operand 0, single buffered']
    #allocation3 [shape = 's32[1]{0}', space=sflag, size = 0x4, scoped, tag = 'scoped memory for tpu_custom_call.1']
    #allocation4 [shape = 's32[1]{0}', space=sflag, size = 0x4, scoped, tag = 'scoped memory for tpu_custom_call.1']
    #allocation5 [shape = 'u8[65536]{0}', space=vmem, size = 0x10000, scoped, tag = 'output window, operand 0, single buffered']
    %8 = vsyncpa [#allocation3], 0
    %9 = vsyncpa [#allocation4], 0
    // Predicated region
    $region2: #{tpu_custom_call.1} parent=1 // pred_check
      _
    $region3: #{tpu_custom_call.1} parent=1 // pred_check_branch
      %11 = sbr.rel (0) target = $region5
    $region4: #{tpu_custom_call.1} parent=1 // pred_region
      %s13 = ssub.s32 2048, 2048
      %14 = vsyncadd [#allocation3], %s13
      %s15 = sshll.u32 [#allocation2], 4
      %s16 = int_to_ptr.vmem [resolvable:$true] %s15
      %21 = dma.hbm_to_vmem [thread:$0]  %s0, 2048, %s16, [#allocation3], 128, 128, 8
    $region5: #{tpu_custom_call.1} parent=1 // pred_fallthru
      _
    // Predicated region
    $region6: #{tpu_custom_call.1} parent=1 // pred_check
      _
    $region7: #{tpu_custom_call.1} parent=1 // pred_check_branch
      %23 = sbr.rel (0) target = $region9
    $region8: #{tpu_custom_call.1} parent=1 // pred_region
      _
    $region9: #{tpu_custom_call.1} parent=1 // pred_fallthru
      _
    // Predicated region
    $region10: #{tpu_custom_call.1} parent=1 // pred_check
      _
    $region11: #{tpu_custom_call.1} parent=1 // pred_check_branch
      %25 = sbr.rel (0) target = $region13
    $region12: #{tpu_custom_call.1} parent=1 // pred_region
      _
    $region13: #{tpu_custom_call.1} parent=1 // pred_fallthru
      _
    // Predicated region
    $region14: #{tpu_custom_call.1} parent=1 // pred_check
      _
    $region15: #{tpu_custom_call.1} parent=1 // pred_check_branch
      %27 = sbr.rel (0) target = $region17
    $region16: #{tpu_custom_call.1} parent=1 // pred_region
      %28 = dma.done [#allocation3], 2048
    $region17: #{tpu_custom_call.1} parent=1 // pred_fallthru
      _
    %v29 = vld [vmem:[#allocation2] sm:$0xff]
    %v30 = vld [vmem:[#allocation2 + $0x8] sm:$0xff]
    %v31 = vld [vmem:[#allocation2 + $0x10] sm:$0xff]
    %v32 = vld [vmem:[#allocation2 + $0x18] sm:$0xff]
    %v33 = vld [vmem:[#allocation2 + $0x20] sm:$0xff]
    %v34 = vld [vmem:[#allocation2 + $0x28] sm:$0xff]
    %v35 = vld [vmem:[#allocation2 + $0x30] sm:$0xff]
    %v36 = vld [vmem:[#allocation2 + $0x38] sm:$0xff]
    %v37 = vld [vmem:[#allocation2 + $0x40] sm:$0xff]
    %v38 = vld [vmem:[#allocation2 + $0x48] sm:$0xff]
    %v39 = vld [vmem:[#allocation2 + $0x50] sm:$0xff]
    %v40 = vld [vmem:[#allocation2 + $0x58] sm:$0xff]
    %v41 = vld [vmem:[#allocation2 + $0x60] sm:$0xff]
    %v42 = vld [vmem:[#allocation2 + $0x68] sm:$0xff]
    %v43 = vld [vmem:[#allocation2 + $0x70] sm:$0xff]
    %v44 = vld [vmem:[#allocation2 + $0x78] sm:$0xff]
    %45 = vadd.xlane.f32.xlu0 %v29
    %v46 = vpop.xlane.xlu0 %45
    %47 = vadd.xlane.f32.xlu0 %v30
    %v48 = vpop.xlane.xlu0 %47
    %49 = vadd.xlane.f32.xlu0 %v31
    %v50 = vpop.xlane.xlu0 %49
    %51 = vadd.xlane.f32.xlu0 %v32
    %v52 = vpop.xlane.xlu0 %51
    %53 = vadd.xlane.f32.xlu0 %v33
    %v54 = vpop.xlane.xlu0 %53
    %55 = vadd.xlane.f32.xlu0 %v34
    %v56 = vpop.xlane.xlu0 %55
    %57 = vadd.xlane.f32.xlu0 %v35
    %v58 = vpop.xlane.xlu0 %57
    %59 = vadd.xlane.f32.xlu0 %v36
    %v60 = vpop.xlane.xlu0 %59
    %61 = vadd.xlane.f32.xlu0 %v37
    %v62 = vpop.xlane.xlu0 %61
    %63 = vadd.xlane.f32.xlu0 %v38
    %v64 = vpop.xlane.xlu0 %63
    %65 = vadd.xlane.f32.xlu0 %v39
    %v66 = vpop.xlane.xlu0 %65
    %67 = vadd.xlane.f32.xlu0 %v40
    %v68 = vpop.xlane.xlu0 %67
    %69 = vadd.xlane.f32.xlu0 %v41
    %v70 = vpop.xlane.xlu0 %69
    %71 = vadd.xlane.f32.xlu0 %v42
    %v72 = vpop.xlane.xlu0 %71
    %73 = vadd.xlane.f32.xlu0 %v43
    %v74 = vpop.xlane.xlu0 %73
    %75 = vadd.xlane.f32.xlu0 %v44
    %v76 = vpop.xlane.xlu0 %75
    %v77 = vmul.f32 %v46, 0.0078125
    %v78 = vmul.f32 %v48, 0.0078125
    %v79 = vmul.f32 %v50, 0.0078125
    %v80 = vmul.f32 %v52, 0.0078125
    %v81 = vmul.f32 %v54, 0.0078125
    %v82 = vmul.f32 %v56, 0.0078125
    %v83 = vmul.f32 %v58, 0.0078125
    %v84 = vmul.f32 %v60, 0.0078125
    %v85 = vmul.f32 %v62, 0.0078125
    %v86 = vmul.f32 %v64, 0.0078125
    %v87 = vmul.f32 %v66, 0.0078125
    %v88 = vmul.f32 %v68, 0.0078125
    %v89 = vmul.f32 %v70, 0.0078125
    %v90 = vmul.f32 %v72, 0.0078125
    %v91 = vmul.f32 %v74, 0.0078125
    %v92 = vmul.f32 %v76, 0.0078125
    %v93 = vld [vmem:[%s1] sm:$0xff]
    %v94 = vld [vmem:[%s1 + $0x8] sm:$0xff]
    %v95 = vld [vmem:[%s1 + $0x10] sm:$0xff]
    %v96 = vld [vmem:[%s1 + $0x18] sm:$0xff]
    %v97 = vld [vmem:[%s1 + $0x20] sm:$0xff]
    %v98 = vld [vmem:[%s1 + $0x28] sm:$0xff]
    %v99 = vld [vmem:[%s1 + $0x30] sm:$0xff]
    %v100 = vld [vmem:[%s1 + $0x38] sm:$0xff]
    %v117 = vlaneseq
    %v118 = vand.u32 %v117, 127
    %v119 = vlaneseq
    %v120 = vshrl.u32 %v119, 7
    %v121 = vsub.s32 %v118, %v120
    %v122 = vrot.slane %v77, %v121
    %v123 = vadd.s32 %v118, 4294967288
    %v124 = vlaneseq
    %v125 = vshrl.u32 %v124, 7
    %v126 = vsub.s32 %v123, %v125
    %v127 = vrot.slane %v78, %v126
    %vm128 = vcmask 130112
    %v129 = vsel %vm128, %v127, %v122
    %v130 = vadd.s32 %v118, 4294967280
    %v131 = vlaneseq
    %v132 = vshrl.u32 %v131, 7
    %v133 = vsub.s32 %v130, %v132
    %v134 = vrot.slane %v79, %v133
    %vm135 = vcmask 195712
    %v136 = vsel %vm135, %v134, %v129
    %v137 = vadd.s32 %v118, 4294967272
    %v138 = vlaneseq
    %v139 = vshrl.u32 %v138, 7
    %v140 = vsub.s32 %v137, %v139
    %v141 = vrot.slane %v80, %v140
    %vm142 = vcmask 261312
    %v143 = vsel %vm142, %v141, %v136
    %v144 = vadd.s32 %v118, 4294967264
    %v145 = vlaneseq
    %v146 = vshrl.u32 %v145, 7
    %v147 = vsub.s32 %v144, %v146
    %v148 = vrot.slane %v81, %v147
    %vm149 = vcmask 326912
    %v150 = vsel %vm149, %v148, %v143
    %v151 = vadd.s32 %v118, 4294967256
    %v152 = vlaneseq
    %v153 = vshrl.u32 %v152, 7
    %v154 = vsub.s32 %v151, %v153
    %v155 = vrot.slane %v82, %v154
    %vm156 = vcmask 392512
    %v157 = vsel %vm156, %v155, %v150
    %v158 = vadd.s32 %v118, 4294967248
    %v159 = vlaneseq
    %v160 = vshrl.u32 %v159, 7
    %v161 = vsub.s32 %v158, %v160
    %v162 = vrot.slane %v83, %v161
    %vm163 = vcmask 458112
    %v164 = vsel %vm163, %v162, %v157
    %v165 = vadd.s32 %v118, 4294967240
    %v166 = vlaneseq
    %v167 = vshrl.u32 %v166, 7
    %v168 = vsub.s32 %v165, %v167
    %v169 = vrot.slane %v84, %v168
    %vm170 = vcmask 523712
    %v171 = vsel %vm170, %v169, %v164
    %v172 = vlaneseq
    %v173 = vshrl.u32 %v172, 7
    %v174 = vsub.s32 %v118, %v173
    %v175 = vrot.slane %v85, %v174
    %v176 = vlaneseq
    %v177 = vshrl.u32 %v176, 7
    %v178 = vsub.s32 %v123, %v177
    %v179 = vrot.slane %v86, %v178
    %v180 = vsel %vm128, %v179, %v175
    %v181 = vlaneseq
    %v182 = vshrl.u32 %v181, 7
    %v183 = vsub.s32 %v130, %v182
    %v184 = vrot.slane %v87, %v183
    %v185 = vsel %vm135, %v184, %v180
    %v186 = vlaneseq
    %v187 = vshrl.u32 %v186, 7
    %v188 = vsub.s32 %v137, %v187
    %v189 = vrot.slane %v88, %v188
    %v190 = vsel %vm142, %v189, %v185
    %v191 = vlaneseq
    %v192 = vshrl.u32 %v191, 7
    %v193 = vsub.s32 %v144, %v192
    %v194 = vrot.slane %v89, %v193
    %v195 = vsel %vm149, %v194, %v190
    %v196 = vlaneseq
    %v197 = vshrl.u32 %v196, 7
    %v198 = vsub.s32 %v151, %v197
    %v199 = vrot.slane %v90, %v198
    %v200 = vsel %vm156, %v199, %v195
    %v201 = vlaneseq
    %v202 = vshrl.u32 %v201, 7
    %v203 = vsub.s32 %v158, %v202
    %v204 = vrot.slane %v91, %v203
    %v205 = vsel %vm163, %v204, %v200
    %v206 = vlaneseq
    %v207 = vshrl.u32 %v206, 7
    %v208 = vsub.s32 %v165, %v207
    %v209 = vrot.slane %v92, %v208
    %v210 = vsel %vm170, %v209, %v205
    %vm211 = vcmask 1041409
    %v212 = vsel %vm211, %v210, %v171
    %vm213 = vcmask 523264
    %v214 = vsel %vm213, %v212, 0
    %216 = vmatprep.subr.mxu0 0.0
    %217 = vmatpush1.msra.mxu0 0.0
    %218 = vmatprep.subr.mxu0 0.0
    %219 = vmatpush1.msra.mxu0 0.0
    %220 = vmatprep.subr.mxu0 0.0
    %221 = vmatpush1.msra.mxu0 0.0
    %222 = vmatprep.subr.mxu0 0.0
    %223 = vmatpush1.msra.mxu0 0.0
    %224 = vmatprep.subr.mxu0 0.0
    %225 = vmatpush1.msra.mxu0 0.0
    %226 = vmatprep.subr.mxu0 0.0
    %227 = vmatpush1.msra.mxu0 0.0
    %228 = vmatprep.subr.mxu0 0.0
    %229 = vmatpush1.msra.mxu0 0.0
    %230 = vmatprep.subr.mxu0 0.0
    %231 = vmatpush1.msra.mxu0 0.0
    %232 = vmatprep.subr.mxu0 0.0
    %233 = vmatpush1.msra.mxu0 %v100
    %234 = vmatprep.subr.mxu0 0.0
    %235 = vmatpush1.msra.mxu0 %v99
    %236 = vmatprep.subr.mxu0 0.0
    %237 = vmatpush1.msra.mxu0 %v98
    %238 = vmatprep.subr.mxu0 0.0
    %239 = vmatpush1.msra.mxu0 %v97
    %240 = vmatprep.subr.mxu0 0.0
    %241 = vmatpush1.msra.mxu0 %v96
    %242 = vmatprep.subr.mxu0 0.0
    %243 = vmatpush1.msra.mxu0 %v95
    %244 = vmatprep.subr.mxu0 0.0
    %245 = vmatpush1.msra.mxu0 %v94
    %246 = vmatprep.subr.mxu0 0.0
    %247 = vmatpush1.msra.mxu0 %v93
    %248 = vmatprep.subr.mxu0 0.0
    %249 = vmatpush2.msra.mxu0 0.0
    %250 = vmatprep.subr.mxu0 0.0
    %251 = vmatpush2.msra.mxu0 0.0
    %252 = vmatprep.subr.mxu0 0.0
    %253 = vmatpush2.msra.mxu0 0.0
    %254 = vmatprep.subr.mxu0 0.0
    %255 = vmatpush2.msra.mxu0 0.0
    %256 = vmatprep.subr.mxu0 0.0
    %257 = vmatpush2.msra.mxu0 0.0
    %258 = vmatprep.subr.mxu0 0.0
    %259 = vmatpush2.msra.mxu0 0.0
    %260 = vmatprep.subr.mxu0 0.0
    %261 = vmatpush2.msra.mxu0 0.0
    %262 = vmatprep.subr.mxu0 0.0
    %263 = vmatpush2.msra.mxu0 0.0
    %264 = vmatprep.subr.mxu0 0.0
    %265 = vmatpush2.msra.mxu0 0.0
    %266 = vmatprep.subr.mxu0 0.0
    %267 = vmatpush2.msra.mxu0 0.0
    %268 = vmatprep.subr.mxu0 0.0
    %269 = vmatpush2.msra.mxu0 0.0
    %270 = vmatprep.subr.mxu0 0.0
    %271 = vmatpush2.msra.mxu0 0.0
    %272 = vmatprep.subr.mxu0 0.0
    %273 = vmatpush2.msra.mxu0 0.0
    %274 = vmatprep.subr.mxu0 0.0
    %275 = vmatpush2.msra.mxu0 0.0
    %276 = vmatprep.subr.mxu0 0.0
    %277 = vmatpush2.msra.mxu0 0.0
    %278 = vmatprep.subr.mxu0 0.0
    %279 = vmatpush2.msra.mxu0 0.0
    %280 = vmatprep.mubr.f32.mxu0 0.0
    %281 = vmatmul.mubr.f32.gmra.mxu0 %v214
    %v282 = vpop.f32.mrf.mxu0
    %v283 = vadd.f32 0.0, %v282
    %v284 = vpop.f32.mrf.mxu0
    %285 = vdwg.mxu0
    %v286 = vmax.f32 %v283, 0.0
    %v287 = vld [vmem:[%s2] sm:$0xf]
    %vm288 = vcmask 31744
    %v290 = vsel %vm288, %v286, 0
    %vm292 = vcmask 1043456
    %v294 = vsel %vm292, %v287, 0
    %296 = vmatprep.subr.mxu0 0.0
    %297 = vmatpush1.msra.mxu0 0.0
    %298 = vmatprep.subr.mxu0 0.0
    %299 = vmatpush1.msra.mxu0 0.0
    %300 = vmatprep.subr.mxu0 0.0
    %301 = vmatpush1.msra.mxu0 0.0
    %302 = vmatprep.subr.mxu0 0.0
    %303 = vmatpush1.msra.mxu0 0.0
    %304 = vmatprep.subr.mxu0 0.0
    %305 = vmatpush1.msra.mxu0 0.0
    %306 = vmatprep.subr.mxu0 0.0
    %307 = vmatpush1.msra.mxu0 0.0
    %308 = vmatprep.subr.mxu0 0.0
    %309 = vmatpush1.msra.mxu0 0.0
    %310 = vmatprep.subr.mxu0 0.0
    %311 = vmatpush1.msra.mxu0 0.0
    %312 = vmatprep.subr.mxu0 0.0
    %313 = vmatpush1.msra.mxu0 0.0
    %314 = vmatprep.subr.mxu0 0.0
    %315 = vmatpush1.msra.mxu0 0.0
    %316 = vmatprep.subr.mxu0 0.0
    %317 = vmatpush1.msra.mxu0 0.0
    %318 = vmatprep.subr.mxu0 0.0
    %319 = vmatpush1.msra.mxu0 0.0
    %320 = vmatprep.subr.mxu0 0.0
    %321 = vmatpush1.msra.mxu0 0.0
    %322 = vmatprep.subr.mxu0 0.0
    %323 = vmatpush1.msra.mxu0 0.0
    %324 = vmatprep.subr.mxu0 0.0
    %325 = vmatpush1.msra.mxu0 0.0
    %326 = vmatprep.subr.mxu0 0.0
    %327 = vmatpush1.msra.mxu0 %v294
    %328 = vmatprep.subr.mxu0 0.0
    %329 = vmatpush2.msra.mxu0 0.0
    %330 = vmatprep.subr.mxu0 0.0
    %331 = vmatpush2.msra.mxu0 0.0
    %332 = vmatprep.subr.mxu0 0.0
    %333 = vmatpush2.msra.mxu0 0.0
    %334 = vmatprep.subr.mxu0 0.0
    %335 = vmatpush2.msra.mxu0 0.0
    %336 = vmatprep.subr.mxu0 0.0
    %337 = vmatpush2.msra.mxu0 0.0
    %338 = vmatprep.subr.mxu0 0.0
    %339 = vmatpush2.msra.mxu0 0.0
    %340 = vmatprep.subr.mxu0 0.0
    %341 = vmatpush2.msra.mxu0 0.0
    %342 = vmatprep.subr.mxu0 0.0
    %343 = vmatpush2.msra.mxu0 0.0
    %344 = vmatprep.subr.mxu0 0.0
    %345 = vmatpush2.msra.mxu0 0.0
    %346 = vmatprep.subr.mxu0 0.0
    %347 = vmatpush2.msra.mxu0 0.0
    %348 = vmatprep.subr.mxu0 0.0
    %349 = vmatpush2.msra.mxu0 0.0
    %350 = vmatprep.subr.mxu0 0.0
    %351 = vmatpush2.msra.mxu0 0.0
    %352 = vmatprep.subr.mxu0 0.0
    %353 = vmatpush2.msra.mxu0 0.0
    %354 = vmatprep.subr.mxu0 0.0
    %355 = vmatpush2.msra.mxu0 0.0
    %356 = vmatprep.subr.mxu0 0.0
    %357 = vmatpush2.msra.mxu0 0.0
    %358 = vmatprep.subr.mxu0 0.0
    %359 = vmatpush2.msra.mxu0 0.0
    %360 = vmatprep.mubr.f32.mxu0 0.0
    %361 = vmatmul.mubr.f32.gmra.mxu0 %v290
    %v362 = vpop.f32.mrf.mxu0
    %v363 = vadd.f32 0.0, %v362
    %v364 = vpop.f32.mrf.mxu0
    %365 = vdwg.mxu0
    %v366 = vxor.u32 %v363, 2147483648
    %v367 = vmul.f32 %v366, 1.442695
    %v368 = vpow.pop %v367
    %v369 = vadd.f32 %v368, 1.0
    %v370 = vrcp.pop %v369
    %v371 = vmul.f32 1.0, %v370
    %v372 = vlaneseq
    %v373 = vshrl.u32 %v372, 7
    %v374 = vsub.s32 0, %v373
    %v375 = vrot.slane %v371, %v374
    %377 = vbcast.lane.b32.xlu0 %v375, 256
    %v378 = vpop.permute.xlu0 %377
    %s380 = sor.u32 256, 8
    %381 = vbcast.lane.b32.xlu0 %v375, %s380
    %v382 = vpop.permute.xlu0 %381
    %s384 = sor.u32 256, 16
    %385 = vbcast.lane.b32.xlu0 %v375, %s384
    %v386 = vpop.permute.xlu0 %385
    %s388 = sor.u32 256, 24
    %389 = vbcast.lane.b32.xlu0 %v375, %s388
    %v390 = vpop.permute.xlu0 %389
    %s392 = sor.u32 256, 32
    %393 = vbcast.lane.b32.xlu0 %v375, %s392
    %v394 = vpop.permute.xlu0 %393
    %s396 = sor.u32 256, 40
    %397 = vbcast.lane.b32.xlu0 %v375, %s396
    %v398 = vpop.permute.xlu0 %397
    %s400 = sor.u32 256, 48
    %401 = vbcast.lane.b32.xlu0 %v375, %s400
    %v402 = vpop.permute.xlu0 %401
    %s404 = sor.u32 256, 56
    %405 = vbcast.lane.b32.xlu0 %v375, %s404
    %v406 = vpop.permute.xlu0 %405
    %v407 = vlaneseq
    %v408 = vshrl.u32 %v407, 7
    %v409 = vsub.s32 1, %v408
    %v410 = vrot.slane %v371, %v409
    %412 = vbcast.lane.b32.xlu0 %v410, 256
    %v413 = vpop.permute.xlu0 %412
    %s415 = sor.u32 256, 8
    %416 = vbcast.lane.b32.xlu0 %v410, %s415
    %v417 = vpop.permute.xlu0 %416
    %s419 = sor.u32 256, 16
    %420 = vbcast.lane.b32.xlu0 %v410, %s419
    %v421 = vpop.permute.xlu0 %420
    %s423 = sor.u32 256, 24
    %424 = vbcast.lane.b32.xlu0 %v410, %s423
    %v425 = vpop.permute.xlu0 %424
    %s427 = sor.u32 256, 32
    %428 = vbcast.lane.b32.xlu0 %v410, %s427
    %v429 = vpop.permute.xlu0 %428
    %s431 = sor.u32 256, 40
    %432 = vbcast.lane.b32.xlu0 %v410, %s431
    %v433 = vpop.permute.xlu0 %432
    %s435 = sor.u32 256, 48
    %436 = vbcast.lane.b32.xlu0 %v410, %s435
    %v437 = vpop.permute.xlu0 %436
    %s439 = sor.u32 256, 56
    %440 = vbcast.lane.b32.xlu0 %v410, %s439
    %v441 = vpop.permute.xlu0 %440
    %v442 = vmul.f32 %v29, %v378
    %v443 = vmul.f32 %v30, %v382
    %v444 = vmul.f32 %v31, %v386
    %v445 = vmul.f32 %v32, %v390
    %v446 = vmul.f32 %v33, %v394
    %v447 = vmul.f32 %v34, %v398
    %v448 = vmul.f32 %v35, %v402
    %v449 = vmul.f32 %v36, %v406
    %v450 = vmul.f32 %v37, %v413
    %v451 = vmul.f32 %v38, %v417
    %v452 = vmul.f32 %v39, %v421
    %v453 = vmul.f32 %v40, %v425
    %v454 = vmul.f32 %v41, %v429
    %v455 = vmul.f32 %v42, %v433
    %v456 = vmul.f32 %v43, %v437
    %v457 = vmul.f32 %v44, %v441
    %458 = vst [vmem:[#allocation5] sm:$0xff] %v442
    %459 = vst [vmem:[#allocation5 + $0x8] sm:$0xff] %v443
    %460 = vst [vmem:[#allocation5 + $0x10] sm:$0xff] %v444
    %461 = vst [vmem:[#allocation5 + $0x18] sm:$0xff] %v445
    %462 = vst [vmem:[#allocation5 + $0x20] sm:$0xff] %v446
    %463 = vst [vmem:[#allocation5 + $0x28] sm:$0xff] %v447
    %464 = vst [vmem:[#allocation5 + $0x30] sm:$0xff] %v448
    %465 = vst [vmem:[#allocation5 + $0x38] sm:$0xff] %v449
    %466 = vst [vmem:[#allocation5 + $0x40] sm:$0xff] %v450
    %467 = vst [vmem:[#allocation5 + $0x48] sm:$0xff] %v451
    %468 = vst [vmem:[#allocation5 + $0x50] sm:$0xff] %v452
    %469 = vst [vmem:[#allocation5 + $0x58] sm:$0xff] %v453
    %470 = vst [vmem:[#allocation5 + $0x60] sm:$0xff] %v454
    %471 = vst [vmem:[#allocation5 + $0x68] sm:$0xff] %v455
    %472 = vst [vmem:[#allocation5 + $0x70] sm:$0xff] %v456
    %473 = vst [vmem:[#allocation5 + $0x78] sm:$0xff] %v457
    // Predicated region
    $region18: #{tpu_custom_call.1} parent=1 // pred_check
      _
    $region19: #{tpu_custom_call.1} parent=1 // pred_check_branch
      %475 = sbr.rel (0) target = $region21
    $region20: #{tpu_custom_call.1} parent=1 // pred_region
      %s477 = ssub.s32 2048, 2048
      %478 = vsyncadd [#allocation4], %s477
      %s479 = sshll.u32 [#allocation5], 4
      %s480 = int_to_ptr.vmem [resolvable:$true] %s479
      %485 = dma.vmem_to_hbm [thread:$0]  %s480, 2048, %s3, [#allocation4], 128, 128, 8
    $region21: #{tpu_custom_call.1} parent=1 // pred_fallthru
      _
    // Predicated region
    $region22: #{tpu_custom_call.1} parent=1 // pred_check
      _
    $region23: #{tpu_custom_call.1} parent=1 // pred_check_branch
      %487 = sbr.rel (0) target = $region25
    $region24: #{tpu_custom_call.1} parent=1 // pred_region
      %488 = dma.done [#allocation4], 2048
    $region25: #{tpu_custom_call.1} parent=1 // pred_fallthru
      _
    %489 = vsyncpa [#allocation3], 1
    %490 = vsyncpa [#allocation4], 1

</llo_original>
